<compile_context>
chip_gen: v7x
topology: tpu7x:2x2x1
jax: 0.10.0
libtpu: 0.0.40
codegen_flags: <defaults>
</compile_context>

<pallas_src>
import functools

import jax
import jax.numpy as jnp
from jax.experimental import pallas as pl
from jax.experimental.pallas import tpu as pltpu


# ----------------------------------------------------------------------------- helpers
def _round_up(x, m):
    return ((x + m - 1) // m) * m


def _pad_to(x, shape):
    pads = [(0, s - d) for d, s in zip(x.shape, shape)]
    return jnp.pad(x, pads)


def _vmem_capacity_bytes():
    try:
        return int(pltpu.get_tpu_info().vmem_capacity_bytes)
    except Exception:
        return 64 << 20  # conservative fallback (v7x per-TC VMEM)


# ------------------------------------------------------------------ kernel (resident)
def _rnn_kernel_resident(*refs, n_layers, has_rest):
    """All layer weights resident in VMEM; one grid axis over batch tiles.

    refs (has_rest=True):
      src (TB,NI), h0 (L,TB,H), w_ih0 (NI,H), w_ihr (L-1,H,H), w_hh (L,H,H),
      b (L,1,H), w_out (H,NO), b_out (1,NO), out (TB,NO), hidden (L,TB,H)
    """
    if has_rest:
        (src_ref, h0_ref, w_ih0_ref, w_ihr_ref, w_hh_ref, b_ref,
         w_out_ref, b_out_ref, out_ref, hidden_ref) = refs
    else:
        (src_ref, h0_ref, w_ih0_ref, w_hh_ref, b_ref,
         w_out_ref, b_out_ref, out_ref, hidden_ref) = refs
        w_ihr_ref = None

    # Plain x @ W: contract last dim of x with first dim of W (weights pre-transposed).
    dn = (((1,), (0,)), ((), ()))

    x = src_ref[...]
    for l in range(n_layers):            # static unroll: layers are sequentially dependent
        w_ih = w_ih0_ref[...] if l == 0 else w_ihr_ref[l - 1]
        gates = (
            jax.lax.dot_general(x, w_ih, dn, preferred_element_type=jnp.float32)
            + jax.lax.dot_general(h0_ref[l], w_hh_ref[l], dn,
                                  preferred_element_type=jnp.float32)
            + b_ref[l].astype(jnp.float32)
        )
        h = jnp.maximum(gates, 0.0)                       # relu nonlinearity
        hidden_ref[l] = h.astype(hidden_ref.dtype)
        x = h.astype(src_ref.dtype)

    out = (jax.lax.dot_general(x, w_out_ref[...], dn, preferred_element_type=jnp.float32)
           + b_out_ref[...].astype(jnp.float32))
    out_ref[...] = out.astype(out_ref.dtype)


# ------------------------------------------------------------------ kernel (streamed)
def _rnn_kernel_streamed(src_ref, h0_ref, w_ih0_ref, w_ihr_ref, w_hh_ref, b_ref,
                         w_out_ref, b_out_ref, out_ref, hidden_ref,
                         x_scratch, acc_scratch):
    """Layer weights streamed per grid step (grid = (batch_tiles, n_layers)).

    src (TB,NI), h0 block (1,TB,H), w_ih0 (NI,H) resident, w_ihr block (1,H,H),
    w_hh block (1,H,H), b block (1,1,H), w_out (H,NO), b_out (1,NO),
    out (TB,NO) resident across the layer axis, hidden block (1,TB,H),
    x_scratch (TB,H) compute dtype (carries layer input), acc_scratch (TB,H) f32.
    """
    dn = (((1,), (0,)), ((), ()))
    l = pl.program_id(1)

    @pl.when(l == 0)
    def _():
        acc_scratch[...] = jax.lax.dot_general(
            src_ref[...], w_ih0_ref[...], dn, preferred_element_type=jnp.float32)

    @pl.when(l > 0)
    def _():
        acc_scratch[...] = jax.lax.dot_general(
            x_scratch[...], w_ihr_ref[0], dn, preferred_element_type=jnp.float32)

    gates = (acc_scratch[...]
             + jax.lax.dot_general(h0_ref[0], w_hh_ref[0], dn,
                                   preferred_element_type=jnp.float32)
             + b_ref[0].astype(jnp.float32))
    h = jnp.maximum(gates, 0.0)
    hidden_ref[0] = h.astype(hidden_ref.dtype)
    x_scratch[...] = h.astype(x_scratch.dtype)

    @pl.when(l == pl.num_programs(1) - 1)
    def _():
        out = (jax.lax.dot_general(x_scratch[...], w_out_ref[...], dn,
                                   preferred_element_type=jnp.float32)
               + b_out_ref[...].astype(jnp.float32))
        out_ref[...] = out.astype(out_ref.dtype)


# ----------------------------------------------------------------------------- wrapper
def prepare_params(params, compute_dtype=jnp.float32):
    """One-time host-side layout conversion from PyTorch layout to kernel layout.

    PyTorch layout in:
      w_ih0 (H,n_input), w_ihr (max(L-1,1),H,H), w_hh (L,H,H), b_ih (L,H), b_hh (L,H),
      w_out (n_out,H), b_out (n_out,)
    Kernel layout out: transposed (contract on dim 0), 128-lane padded (also n_input),
      biases fused, compute-dtype weights; w_ihr dropped when L == 1.
    """
    w_ih0, w_ihr, w_hh, b_ih, b_hh, w_out, b_out = params
    n_layers, n_hidden = b_ih.shape
    n_input = w_ih0.shape[1]
    n_output = w_out.shape[0]

    H = _round_up(n_hidden, 128)
    NO = _round_up(n_output, 128)
    NI = _round_up(n_input, 128)

    w_ih0_k = _pad_to(w_ih0.T, (NI, H)).astype(compute_dtype)
    if n_layers > 1:
        w_ihr_k = _pad_to(jnp.swapaxes(w_ihr[:n_layers - 1], 1, 2),
                          (n_layers - 1, H, H)).astype(compute_dtype)
    else:
        w_ihr_k = None                      # never read; don't DMA or buffer it
    w_hh_k = _pad_to(jnp.swapaxes(w_hh, 1, 2), (n_layers, H, H)).astype(compute_dtype)
    b_k = _pad_to((b_ih + b_hh)[:, None, :], (n_layers, 1, H)).astype(jnp.float32)
    w_out_k = _pad_to(w_out.T, (H, NO)).astype(compute_dtype)
    b_out_k = _pad_to(b_out[None, :], (1, NO)).astype(jnp.float32)
    return dict(w_ih0=w_ih0_k, w_ihr=w_ihr_k, w_hh=w_hh_k, b=b_k,
                w_out=w_out_k, b_out=b_out_k)


def rnn_forward(src, initial_hidden, kernel_params, *, n_output,
                compute_dtype=jnp.float32, block_b=None, layer_stream=None):
    """Pallas equivalent of RNN.forward(src, initial_hidden) -> (output, hidden)."""
    w_ih0 = kernel_params["w_ih0"]
    w_ihr = kernel_params["w_ihr"]
    w_hh = kernel_params["w_hh"]
    b = kernel_params["b"]
    w_out = kernel_params["w_out"]
    b_out = kernel_params["b_out"]

    n_layers, _, n_hidden = initial_hidden.shape
    B, _ = src.shape
    NI = w_ih0.shape[0]          # 128-padded input width
    H = w_hh.shape[1]            # 128-padded hidden width
    NO = w_out.shape[1]          # 128-padded output width
    itemsize = jnp.dtype(compute_dtype).itemsize
    hidden_dtype = compute_dtype           # bf16 writeback in bf16 mode
    cap = _vmem_capacity_bytes()

    # ---- batch tiling: >=2 grid steps when B is big enough (fills both v7x TCs),
    #      16-sublane tiles in bf16 mode (packed vregs), generation-aware cap.
    sub = 16 if itemsize < 4 else 8
    if block_b is None:
        block_b = 512 if cap >= (96 << 20) else 256
    if B > sub:
        tb = min(_round_up(block_b, sub), _round_up(-(-B // 2), sub))
    else:
        tb = _round_up(B, sub)
    b_pad = _round_up(B, tb)
    nb = b_pad // tb

    src_p = _pad_to(src.astype(compute_dtype), (b_pad, NI))
    h0_p = _pad_to(initial_hidden.astype(compute_dtype), (n_layers, b_pad, H))

    # ---- resident footprint (weights single-buffered via Buffered(1), tiles 2-buffered)
    weight_bytes = ((w_ih0.size + (w_ihr.size if w_ihr is not None else 0)
                     + w_hh.size + w_out.size) * itemsize
                    + (b.size + b_out.size) * 4)
    tile_bytes = ((tb * NI + n_layers * tb * H) * itemsize
                  + tb * NO * 4
                  + n_layers * tb * H * jnp.dtype(hidden_dtype).itemsize)
    resident_need = weight_bytes + 2 * tile_bytes

    if layer_stream is None:
        layer_stream = (n_layers > 1) and (resident_need > int(cap * 0.7))
    layer_stream = bool(layer_stream) and (n_layers > 1)

    res1 = pl.Buffered(1)        # grid-invariant operands: no pointless double buffer

    if not layer_stream:
        kernel = functools.partial(_rnn_kernel_resident, n_layers=n_layers,
                                   has_rest=w_ihr is not None)
        grid = (nb,)
        dim_sem = ("parallel",)
        scratch_shapes = []
        ins = [src_p, h0_p, w_ih0]
        in_specs = [
            pl.BlockSpec((tb, NI), lambda i: (i, 0)),                    # src (batch-tiled)
            pl.BlockSpec((n_layers, tb, H), lambda i: (0, i, 0)),        # h0  (batch-tiled)
            pl.BlockSpec((NI, H), lambda i: (0, 0), pipeline_mode=res1),  # w_ih layer 0
        ]
        if w_ihr is not None:
            ins.append(w_ihr)
            in_specs.append(pl.BlockSpec((n_layers - 1, H, H), lambda i: (0, 0, 0),
                                         pipeline_mode=res1))            # w_ih layers >= 1
        ins += [w_hh, b, w_out, b_out]
        in_specs += [
            pl.BlockSpec((n_layers, H, H), lambda i: (0, 0, 0), pipeline_mode=res1),
            pl.BlockSpec((n_layers, 1, H), lambda i: (0, 0, 0), pipeline_mode=res1),
            pl.BlockSpec((H, NO), lambda i: (0, 0), pipeline_mode=res1),
            pl.BlockSpec((1, NO), lambda i: (0, 0), pipeline_mode=res1),
        ]
        out_specs = (
            pl.BlockSpec((tb, NO), lambda i: (i, 0)),
            pl.BlockSpec((n_layers, tb, H), lambda i: (0, i, 0)),
        )
        vmem_need = resident_need
    else:
        # Stream per-layer weights: grid = (batch_tiles, n_layers), layer axis arbitrary.
        kernel = _rnn_kernel_streamed
        grid = (nb, n_layers)
        dim_sem = ("parallel", "arbitrary")
        scratch_shapes = [pltpu.VMEM((tb, H), compute_dtype),   # x carried across layers
                          pltpu.VMEM((tb, H), jnp.float32)]     # f32 input-gate accumulator
        ins = [src_p, h0_p, w_ih0, w_ihr, w_hh, b, w_out, b_out]
        in_specs = [
            pl.BlockSpec((tb, NI), lambda i, l: (i, 0)),
            pl.BlockSpec((1, tb, H), lambda i, l: (l, i, 0)),
            pl.BlockSpec((NI, H), lambda i, l: (0, 0), pipeline_mode=res1),
            # layer l>=1 uses w_ihr[l-1]; clamp so l==0 maps to block 0 (same block as
            # l==1 -> the pipeline skips the redundant DMA).
            pl.BlockSpec((1, H, H), lambda i, l: (jnp.maximum(l - 1, 0), 0, 0)),
            pl.BlockSpec((1, H, H), lambda i, l: (l, 0, 0)),
            pl.BlockSpec((1, 1, H), lambda i, l: (l, 0, 0)),
            pl.BlockSpec((H, NO), lambda i, l: (0, 0), pipeline_mode=res1),
            pl.BlockSpec((1, NO), lambda i, l: (0, 0), pipeline_mode=res1),
        ]
        out_specs = (
            pl.BlockSpec((tb, NO), lambda i, l: (i, 0)),        # resident across layer axis
            pl.BlockSpec((1, tb, H), lambda i, l: (l, i, 0)),
        )
        vmem_need = ((w_ih0.size + w_out.size) * itemsize + b_out.size * 4
                     + 2 * (2 * H * H * itemsize + H * 4)           # streamed layer blocks
                     + 2 * ((tb * NI + tb * H) * itemsize + tb * NO * 4
                            + tb * H * jnp.dtype(hidden_dtype).itemsize)
                     + tb * H * itemsize + tb * H * 4)              # scratches

    # Raise the scoped-VMEM limit only when needed, capped to physical VMEM.
    # TODO(synk): if vmem_need itself exceeds physical VMEM, also tile the hidden dim.
    vmem_limit = None
    if vmem_need > (16 << 20):
        vmem_limit = min(int(vmem_need * 3 // 2), cap - (2 << 20))

    flops = int(2 * b_pad * (NI * H + H * H)
                + max(n_layers - 1, 0) * 4 * b_pad * H * H
                + 2 * b_pad * H * NO)
    bytes_accessed = int(sum(a.size * a.dtype.itemsize for a in ins)
                         + b_pad * NO * 4
                         + n_layers * b_pad * H * jnp.dtype(hidden_dtype).itemsize)

    out_p, hidden_p = pl.pallas_call(
        kernel,
        out_shape=(
            jax.ShapeDtypeStruct((b_pad, NO), jnp.float32),
            jax.ShapeDtypeStruct((n_layers, b_pad, H), hidden_dtype),
        ),
        grid_spec=pltpu.PrefetchScalarGridSpec(
            num_scalar_prefetch=0,
            grid=grid,
            in_specs=in_specs,
            out_specs=out_specs,
            scratch_shapes=scratch_shapes,
        ),
        compiler_params=pltpu.CompilerParams(
            dimension_semantics=dim_sem,
            vmem_limit_bytes=vmem_limit,
        ),
        cost_estimate=pl.CostEstimate(
            flops=flops, transcendentals=0, bytes_accessed=bytes_accessed),
    )(*ins)

    # Strip batch / lane padding back off.
    return out_p[:B, :n_output], hidden_p[:, :B, :n_hidden]


# --------------------------------------------------------- PyTorch-layout init + reference
def init_params(key, n_input, n_hidden, n_output, n_layers):
    """Deterministic PyTorch-shaped parameter init (uniform, like nn.RNN/nn.Linear)."""
    k = 1.0 / float(n_hidden) ** 0.5
    keys = jax.random.split(key, 7)
    u = lambda kk, shape: jax.random.uniform(kk, shape, jnp.float32, -k, k)

    w_ih0 = u(keys[0], (n_hidden, n_input))
    l_rest = max(n_layers - 1, 1)
    w_ihr = u(keys[1], (l_rest, n_hidden, n_hidden))
    if n_layers == 1:
        w_ihr = jnp.zeros_like(w_ihr)   # dummy, never used
    w_hh = u(keys[2], (n_layers, n_hidden, n_hidden))
    b_ih = u(keys[3], (n_layers, n_hidden))
    b_hh = u(keys[4], (n_layers, n_hidden))
    w_out = u(keys[5], (n_output, n_hidden))
    b_out = u(keys[6], (n_output,))
    return (w_ih0, w_ihr, w_hh, b_ih, b_hh, w_out, b_out)


def rnn_reference(src, initial_hidden, params):
    """Pure-JAX reference matching torch semantics (seq_len == 1)."""
    w_ih0, w_ihr, w_hh, b_ih, b_hh, w_out, b_out = params
    n_layers = initial_hidden.shape[0]
    x = src
    hs = []
    for l in range(n_layers):
        wi = w_ih0 if l == 0 else w_ihr[l - 1]
        h = jnp.maximum(x @ wi.T + initial_hidden[l] @ w_hh[l].T + b_ih[l] + b_hh[l], 0.0)
        hs.append(h)
        x = h
    out = x @ w_out.T + b_out
    return out, jnp.stack(hs, axis=0)


# --------------------------------------------------------------------------------- demo
if __name__ == "__main__":
    n_input, n_hidden, n_output = 16, 32, 8
    key = jax.random.PRNGKey(0)

    # (n_layers, batch, compute_dtype, force layer_stream, atol/rtol)
    configs = [
        (2, 4, jnp.float32, False, 1e-5),    # resident path, f32
        (2, 4, jnp.bfloat16, False, 1e-1),   # resident path, bf16 weights/activations/hidden
        (3, 20, jnp.float32, True, 1e-5),    # forced layer-streaming path, multi-tile batch
        (1, 4, jnp.float32, False, 1e-5),    # single layer (no w_ihr operand at all)
    ]

    for n_layers, batch, cd, stream, tol in configs:
        k_src, k_h0, k_par, key = jax.random.split(key, 4)
        src = jax.random.normal(k_src, (batch, n_input), jnp.float32)
        initial_hidden = jax.random.normal(k_h0, (n_layers, batch, n_hidden), jnp.float32)
        params_pt = init_params(k_par, n_input, n_hidden, n_output, n_layers)

        out_ref, hidden_ref = rnn_reference(src, initial_hidden, params_pt)

        kparams = prepare_params(params_pt, compute_dtype=cd)
        out, hidden = rnn_forward(src, initial_hidden, kparams, n_output=n_output,
                                  compute_dtype=cd, layer_stream=stream)
        out, hidden = jax.block_until_ready((out, hidden))

        assert out.shape == (batch, n_output)
        assert hidden.shape == (n_layers, batch, n_hidden)
        assert jnp.allclose(out.astype(jnp.float32), out_ref, atol=tol, rtol=tol), \
            (n_layers, batch, cd, stream)
        assert jnp.allclose(hidden.astype(jnp.float32), hidden_ref, atol=tol, rtol=tol), \
            (n_layers, batch, cd, stream)

    print("KERNEL_OK")
</pallas_src>

<mosaic_0001>
module attributes {stable_mosaic.version = 11 : i64} {
  func.func @_rnn_kernel_resident(%arg0: i32, %arg1: memref<8x128xf32, #tpu.memory_space<vmem>>, %arg2: memref<2x8x128xf32, #tpu.memory_space<vmem>>, %arg3: memref<128x128xf32, #tpu.memory_space<vmem>>, %arg4: memref<1x128x128xf32, #tpu.memory_space<vmem>>, %arg5: memref<2x128x128xf32, #tpu.memory_space<vmem>>, %arg6: memref<2x1x128xf32, #tpu.memory_space<vmem>>, %arg7: memref<128x128xf32, #tpu.memory_space<vmem>>, %arg8: memref<1x128xf32, #tpu.memory_space<vmem>>, %arg9: memref<8x128xf32, #tpu.memory_space<vmem>>, %arg10: memref<2x8x128xf32, #tpu.memory_space<vmem>>) attributes {dimension_semantics = [#tpu.dimension_semantics<parallel>], iteration_bounds = array<i64: 1>, scalar_prefetch = 0 : i64, scratch_operands = 0 : i64, tpu.core_type = #tpu.core_type<tc>, window_params = [{transform_indices = @transform_0, window_bounds = array<i64: 8, 128>}, {transform_indices = @transform_1, window_bounds = array<i64: 2, 8, 128>}, {pipeline_mode = #tpu.pipeline_mode<synchronous>, transform_indices = @transform_2, window_bounds = array<i64: 128, 128>}, {pipeline_mode = #tpu.pipeline_mode<synchronous>, transform_indices = @transform_3, window_bounds = array<i64: 1, 128, 128>}, {pipeline_mode = #tpu.pipeline_mode<synchronous>, transform_indices = @transform_4, window_bounds = array<i64: 2, 128, 128>}, {pipeline_mode = #tpu.pipeline_mode<synchronous>, transform_indices = @transform_5, window_bounds = array<i64: 2, 1, 128>}, {pipeline_mode = #tpu.pipeline_mode<synchronous>, transform_indices = @transform_6, window_bounds = array<i64: 128, 128>}, {pipeline_mode = #tpu.pipeline_mode<synchronous>, transform_indices = @transform_7, window_bounds = array<i64: 1, 128>}, {transform_indices = @transform_8, window_bounds = array<i64: 8, 128>}, {transform_indices = @transform_9, window_bounds = array<i64: 2, 8, 128>}]} {
    %c0 = arith.constant 0 : index
    %c0_0 = arith.constant 0 : index
    %0 = vector.load %arg1[%c0, %c0_0] : memref<8x128xf32, #tpu.memory_space<vmem>>, vector<8x128xf32>
    %c0_1 = arith.constant 0 : index
    %c0_2 = arith.constant 0 : index
    %1 = vector.load %arg3[%c0_1, %c0_2] : memref<128x128xf32, #tpu.memory_space<vmem>>, vector<128x128xf32>
    %cst = arith.constant dense<0.000000e+00> : vector<8x128xf32>
    %2 = tpu.matmul %0, %1, %cst {dimension_numbers = #tpu.dot_dimension_numbers<[1], [0], [0], [1], [0, 0, 1, 1], [], []>} : vector<8x128xf32>, vector<128x128xf32>, vector<8x128xf32> -> vector<8x128xf32>
    %c0_3 = arith.constant 0 : index
    %c0_4 = arith.constant 0 : index
    %c0_5 = arith.constant 0 : index
    %3 = vector.load %arg2[%c0_3, %c0_4, %c0_5] : memref<2x8x128xf32, #tpu.memory_space<vmem>>, vector<1x8x128xf32>
    %4 = vector.shape_cast %3 : vector<1x8x128xf32> to vector<8x128xf32>
    %c0_6 = arith.constant 0 : index
    %c0_7 = arith.constant 0 : index
    %c0_8 = arith.constant 0 : index
    %5 = vector.load %arg5[%c0_6, %c0_7, %c0_8] : memref<2x128x128xf32, #tpu.memory_space<vmem>>, vector<1x128x128xf32>
    %6 = vector.shape_cast %5 : vector<1x128x128xf32> to vector<128x128xf32>
    %cst_9 = arith.constant dense<0.000000e+00> : vector<8x128xf32>
    %7 = tpu.matmul %4, %6, %cst_9 {dimension_numbers = #tpu.dot_dimension_numbers<[1], [0], [0], [1], [0, 0, 1, 1], [], []>} : vector<8x128xf32>, vector<128x128xf32>, vector<8x128xf32> -> vector<8x128xf32>
    %8 = arith.addf %2, %7 : vector<8x128xf32>
    %c0_10 = arith.constant 0 : index
    %c0_11 = arith.constant 0 : index
    %c0_12 = arith.constant 0 : index
    %9 = vector.load %arg6[%c0_10, %c0_11, %c0_12] : memref<2x1x128xf32, #tpu.memory_space<vmem>>, vector<1x1x128xf32>
    %10 = vector.shape_cast %9 : vector<1x1x128xf32> to vector<1x128xf32>
    %11 = vector.broadcast %10 : vector<1x128xf32> to vector<8x128xf32>
    %12 = arith.addf %8, %11 : vector<8x128xf32>
    %cst_13 = arith.constant 0.000000e+00 : f32
    %13 = vector.broadcast %cst_13 : f32 to vector<8x128xf32>
    %14 = arith.maximumf %12, %13 : vector<8x128xf32>
    %c0_14 = arith.constant 0 : index
    %c0_15 = arith.constant 0 : index
    %c0_16 = arith.constant 0 : index
    %15 = vector.load %arg10[%c0_14, %c0_15, %c0_16] : memref<2x8x128xf32, #tpu.memory_space<vmem>>, vector<1x8x128xf32>
    %16 = vector.shape_cast %15 : vector<1x8x128xf32> to vector<8x128xf32>
    %17 = vector.shape_cast %14 : vector<8x128xf32> to vector<1x8x128xf32>
    tpu.vector_store %arg10[%c0_14, %c0_15, %c0_16], %17 {strides = array<i32>} : memref<2x8x128xf32, #tpu.memory_space<vmem>>, vector<1x8x128xf32>,
    %c0_17 = arith.constant 0 : index
    %c0_18 = arith.constant 0 : index
    %c0_19 = arith.constant 0 : index
    %18 = vector.load %arg4[%c0_17, %c0_18, %c0_19] : memref<1x128x128xf32, #tpu.memory_space<vmem>>, vector<1x128x128xf32>
    %19 = vector.shape_cast %18 : vector<1x128x128xf32> to vector<128x128xf32>
    %cst_20 = arith.constant dense<0.000000e+00> : vector<8x128xf32>
    %20 = tpu.matmul %14, %19, %cst_20 {dimension_numbers = #tpu.dot_dimension_numbers<[1], [0], [0], [1], [0, 0, 1, 1], [], []>} : vector<8x128xf32>, vector<128x128xf32>, vector<8x128xf32> -> vector<8x128xf32>
    %c1 = arith.constant 1 : index
    %c0_21 = arith.constant 0 : index
    %c0_22 = arith.constant 0 : index
    %21 = vector.load %arg2[%c1, %c0_21, %c0_22] : memref<2x8x128xf32, #tpu.memory_space<vmem>>, vector<1x8x128xf32>
    %22 = vector.shape_cast %21 : vector<1x8x128xf32> to vector<8x128xf32>
    %c1_23 = arith.constant 1 : index
    %c0_24 = arith.constant 0 : index
    %c0_25 = arith.constant 0 : index
    %23 = vector.load %arg5[%c1_23, %c0_24, %c0_25] : memref<2x128x128xf32, #tpu.memory_space<vmem>>, vector<1x128x128xf32>
    %24 = vector.shape_cast %23 : vector<1x128x128xf32> to vector<128x128xf32>
    %cst_26 = arith.constant dense<0.000000e+00> : vector<8x128xf32>
    %25 = tpu.matmul %22, %24, %cst_26 {dimension_numbers = #tpu.dot_dimension_numbers<[1], [0], [0], [1], [0, 0, 1, 1], [], []>} : vector<8x128xf32>, vector<128x128xf32>, vector<8x128xf32> -> vector<8x128xf32>
    %26 = arith.addf %20, %25 : vector<8x128xf32>
    %c1_27 = arith.constant 1 : index
    %c0_28 = arith.constant 0 : index
    %c0_29 = arith.constant 0 : index
    %27 = vector.load %arg6[%c1_27, %c0_28, %c0_29] : memref<2x1x128xf32, #tpu.memory_space<vmem>>, vector<1x1x128xf32>
    %28 = vector.shape_cast %27 : vector<1x1x128xf32> to vector<1x128xf32>
    %29 = vector.broadcast %28 : vector<1x128xf32> to vector<8x128xf32>
    %30 = arith.addf %26, %29 : vector<8x128xf32>
    %cst_30 = arith.constant 0.000000e+00 : f32
    %31 = vector.broadcast %cst_30 : f32 to vector<8x128xf32>
    %32 = arith.maximumf %30, %31 : vector<8x128xf32>
    %c1_31 = arith.constant 1 : index
    %c0_32 = arith.constant 0 : index
    %c0_33 = arith.constant 0 : index
    %33 = vector.load %arg10[%c1_31, %c0_32, %c0_33] : memref<2x8x128xf32, #tpu.memory_space<vmem>>, vector<1x8x128xf32>
    %34 = vector.shape_cast %33 : vector<1x8x128xf32> to vector<8x128xf32>
    %35 = vector.shape_cast %32 : vector<8x128xf32> to vector<1x8x128xf32>
    tpu.vector_store %arg10[%c1_31, %c0_32, %c0_33], %35 {strides = array<i32>} : memref<2x8x128xf32, #tpu.memory_space<vmem>>, vector<1x8x128xf32>,
    %c0_34 = arith.constant 0 : index
    %c0_35 = arith.constant 0 : index
    %36 = vector.load %arg7[%c0_34, %c0_35] : memref<128x128xf32, #tpu.memory_space<vmem>>, vector<128x128xf32>
    %cst_36 = arith.constant dense<0.000000e+00> : vector<8x128xf32>
    %37 = tpu.matmul %32, %36, %cst_36 {dimension_numbers = #tpu.dot_dimension_numbers<[1], [0], [0], [1], [0, 0, 1, 1], [], []>} : vector<8x128xf32>, vector<128x128xf32>, vector<8x128xf32> -> vector<8x128xf32>
    %c0_37 = arith.constant 0 : index
    %c0_38 = arith.constant 0 : index
    %38 = vector.load %arg8[%c0_37, %c0_38] : memref<1x128xf32, #tpu.memory_space<vmem>>, vector<1x128xf32>
    %39 = vector.broadcast %38 : vector<1x128xf32> to vector<8x128xf32>
    %40 = arith.addf %37, %39 : vector<8x128xf32>
    %c0_39 = arith.constant 0 : index
    %c0_40 = arith.constant 0 : index
    %41 = vector.load %arg9[%c0_39, %c0_40] : memref<8x128xf32, #tpu.memory_space<vmem>>, vector<8x128xf32>
    tpu.vector_store %arg9[%c0_39, %c0_40], %40 {strides = array<i32>} : memref<8x128xf32, #tpu.memory_space<vmem>>, vector<8x128xf32>,
    return
  }
  func.func @transform_0(%arg0: i32) -> (i32, i32) {
    %c0_i32 = arith.constant 0 : i32
    %c0_i32_0 = arith.constant 0 : i32
    return %arg0, %c0_i32 : i32, i32
  }
  func.func @transform_1(%arg0: i32) -> (i32, i32, i32) {
    %c0_i32 = arith.constant 0 : i32
    %c0_i32_0 = arith.constant 0 : i32
    %c0_i32_1 = arith.constant 0 : i32
    return %c0_i32, %arg0, %c0_i32_0 : i32, i32, i32
  }
  func.func @transform_2(%arg0: i32) -> (i32, i32) {
    %c0_i32 = arith.constant 0 : i32
    %c0_i32_0 = arith.constant 0 : i32
    %c0_i32_1 = arith.constant 0 : i32
    return %c0_i32, %c0_i32_0 : i32, i32
  }
  func.func @transform_3(%arg0: i32) -> (i32, i32, i32) {
    %c0_i32 = arith.constant 0 : i32
    %c0_i32_0 = arith.constant 0 : i32
    %c0_i32_1 = arith.constant 0 : i32
    %c0_i32_2 = arith.constant 0 : i32
    return %c0_i32, %c0_i32_0, %c0_i32_1 : i32, i32, i32
  }
  func.func @transform_4(%arg0: i32) -> (i32, i32, i32) {
    %c0_i32 = arith.constant 0 : i32
    %c0_i32_0 = arith.constant 0 : i32
    %c0_i32_1 = arith.constant 0 : i32
    %c0_i32_2 = arith.constant 0 : i32
    return %c0_i32, %c0_i32_0, %c0_i32_1 : i32, i32, i32
  }
  func.func @transform_5(%arg0: i32) -> (i32, i32, i32) {
    %c0_i32 = arith.constant 0 : i32
    %c0_i32_0 = arith.constant 0 : i32
    %c0_i32_1 = arith.constant 0 : i32
    %c0_i32_2 = arith.constant 0 : i32
    return %c0_i32, %c0_i32_0, %c0_i32_1 : i32, i32, i32
  }
  func.func @transform_6(%arg0: i32) -> (i32, i32) {
    %c0_i32 = arith.constant 0 : i32
    %c0_i32_0 = arith.constant 0 : i32
    %c0_i32_1 = arith.constant 0 : i32
    return %c0_i32, %c0_i32_0 : i32, i32
  }
  func.func @transform_7(%arg0: i32) -> (i32, i32) {
    %c0_i32 = arith.constant 0 : i32
    %c0_i32_0 = arith.constant 0 : i32
    %c0_i32_1 = arith.constant 0 : i32
    return %c0_i32, %c0_i32_0 : i32, i32
  }
  func.func @transform_8(%arg0: i32) -> (i32, i32) {
    %c0_i32 = arith.constant 0 : i32
    %c0_i32_0 = arith.constant 0 : i32
    return %arg0, %c0_i32 : i32, i32
  }
  func.func @transform_9(%arg0: i32) -> (i32, i32, i32) {
    %c0_i32 = arith.constant 0 : i32
    %c0_i32_0 = arith.constant 0 : i32
    %c0_i32_1 = arith.constant 0 : i32
    return %c0_i32, %arg0, %c0_i32_0 : i32, i32, i32
  }
}

</mosaic_0001>

<llo_original>
// kernel: tpu_custom_call.1
$region0: #{tpu_custom_call.1}
  #allocation0 [shape = 'u32[]', space=smem, size = 0x4, offset = 0x4, fixed_abs, tag = 'smem constant byte address 0x4 - core index']
  #allocation1 [shape = 'u32[144,128]{1,0:T(1,128)}', space=vmem, size = 0x12000, scoped, tag = 'internal scratch']
  %s0 = inlined_call_operand.hbm [shape: f32[8,128], index: 0, kind: input, shape index: {}]
  %s1 = inlined_call_operand.hbm [shape: f32[2,8,128], index: 1, kind: input, shape index: {}]
  %s2 = inlined_call_operand.hbm [shape: f32[128,128], index: 2, kind: input, shape index: {}]
  %s3 = inlined_call_operand.hbm [shape: f32[1,128,128], index: 3, kind: input, shape index: {}]
  %s4 = inlined_call_operand.hbm [shape: f32[2,128,128], index: 4, kind: input, shape index: {}]
  %s5 = inlined_call_operand.vmem [shape: f32[2,1,128], index: 5, kind: input, shape index: {}]
  %s6 = inlined_call_operand.hbm [shape: f32[128,128], index: 6, kind: input, shape index: {}]
  %s7 = inlined_call_operand.vmem [shape: f32[1,128], index: 7, kind: input, shape index: {}]
  %s8 = inlined_call_operand.hbm [shape: f32[8,128], index: 8, kind: output, shape index: {0}]
  %s9 = inlined_call_operand.hbm [shape: f32[2,8,128], index: 9, kind: output, shape index: {1}]
  %10 = xla_tuple %s8, %s9
  %s11 = sld [smem:[#allocation0]]
  $region74: #{tpu_custom_call.1} parent=0
    _
  %s13 = ssub.s32 1, %s11
  %s14 = scalar_select 0, %s13, %s11
  $region1: #{tpu_custom_call.1} parent=0
    #allocation2 [shape = 'u8[4096]{0}', space=vmem, size = 0x1000, scoped, tag = 'input window, operand 0, single buffered']
    #allocation3 [shape = 's32[1]{0}', space=sflag, size = 0x4, scoped, tag = 'scoped memory for tpu_custom_call.1']
    #allocation4 [shape = 's32[1]{0}', space=sflag, size = 0x4, scoped, tag = 'scoped memory for tpu_custom_call.1']
    #allocation5 [shape = 'u8[8192]{0}', space=vmem, size = 0x2000, scoped, tag = 'input window, operand 1, single buffered']
    #allocation6 [shape = 's32[1]{0}', space=sflag, size = 0x4, scoped, tag = 'scoped memory for tpu_custom_call.1']
    #allocation7 [shape = 'u8[65536]{0}', space=vmem, size = 0x10000, scoped, tag = 'input window, operand 2, single buffered']
    #allocation8 [shape = 'u8[65536]{0}', space=vmem, size = 0x10000, scoped, tag = 'input window, operand 3, single buffered']
    #allocation9 [shape = 's32[1]{0}', space=sflag, size = 0x4, scoped, tag = 'scoped memory for tpu_custom_call.1']
    #allocation10 [shape = 'u8[131072]{0}', space=vmem, size = 0x20000, scoped, tag = 'input window, operand 4, single buffered']
    #allocation11 [shape = 'u8[65536]{0}', space=vmem, size = 0x10000, scoped, tag = 'input window, operand 6, single buffered']
    #allocation12 [shape = 's32[1]{0}', space=sflag, size = 0x4, scoped, tag = 'scoped memory for tpu_custom_call.1']
    #allocation13 [shape = 'u8[4096]{0}', space=vmem, size = 0x1000, scoped, tag = 'output window, operand 0, single buffered']
    #allocation14 [shape = 'u8[8192]{0}', space=vmem, size = 0x2000, scoped, tag = 'output window, operand 1, single buffered']
    #allocation15 [shape = 's32[1]{0}', space=sflag, size = 0x4, scoped, tag = 'scoped memory for tpu_custom_call.1']
    %15 = vsyncpa [#allocation3], 0
    %16 = vsyncpa [#allocation6], 0
    %17 = vsyncpa [#allocation9], 0
    %18 = vsyncpa [#allocation12], 0
    %19 = vsyncpa [#allocation4], 0
    %20 = vsyncpa [#allocation15], 0
    // Predicated region
    $region2: #{tpu_custom_call.1} parent=1 // pred_check
      _
    $region3: #{tpu_custom_call.1} parent=1 // pred_check_branch
      %22 = sbr.rel (0) target = $region5
    $region4: #{tpu_custom_call.1} parent=1 // pred_region
      %s24 = ssub.s32 128, 128
      %25 = vsyncadd [#allocation3], %s24
      %s27 = sshll.u32 [#allocation2], 4
      %s28 = int_to_ptr.vmem [resolvable:$true] %s27
      %30 = dma.hbm_to_vmem [thread:$0]  %s0, 128, %s28, [#allocation3]
    $region5: #{tpu_custom_call.1} parent=1 // pred_fallthru
      _
    // Predicated region
    $region6: #{tpu_custom_call.1} parent=1 // pred_check
      _
    $region7: #{tpu_custom_call.1} parent=1 // pred_check_branch
      %32 = sbr.rel (0) target = $region9
    $region8: #{tpu_custom_call.1} parent=1 // pred_region
      %s34 = ssub.s32 256, 256
      %35 = vsyncadd [#allocation6], %s34
      %s36 = sshll.u32 [#allocation5], 4
      %s37 = int_to_ptr.vmem [resolvable:$true] %s36
      %42 = dma.hbm_to_vmem [thread:$0]  %s1, 256, %s37, [#allocation6], 128, 128, 8
    $region9: #{tpu_custom_call.1} parent=1 // pred_fallthru
      _
    // Predicated region
    $region10: #{tpu_custom_call.1} parent=1 // pred_check
      _
    $region11: #{tpu_custom_call.1} parent=1 // pred_check_branch
      %44 = sbr.rel (0) target = $region13
    $region12: #{tpu_custom_call.1} parent=1 // pred_region
      %s46 = ssub.s32 2048, 2048
      %47 = vsyncadd [#allocation6], %s46
      %s48 = sshll.u32 [#allocation7], 4
      %s49 = int_to_ptr.vmem [resolvable:$true] %s48
      %54 = dma.hbm_to_vmem [thread:$0]  %s2, 2048, %s49, [#allocation6], 128, 128, 8
    $region13: #{tpu_custom_call.1} parent=1 // pred_fallthru
      _
    // Predicated region
    $region14: #{tpu_custom_call.1} parent=1 // pred_check
      _
    $region15: #{tpu_custom_call.1} parent=1 // pred_check_branch
      %56 = sbr.rel (0) target = $region17
    $region16: #{tpu_custom_call.1} parent=1 // pred_region
      %s58 = ssub.s32 2048, 2048
      %59 = vsyncadd [#allocation9], %s58
      %s60 = sshll.u32 [#allocation8], 4
      %s61 = int_to_ptr.vmem [resolvable:$true] %s60
      %66 = dma.hbm_to_vmem [thread:$0]  %s3, 2048, %s61, [#allocation9], 128, 128, 8
    $region17: #{tpu_custom_call.1} parent=1 // pred_fallthru
      _
    // Predicated region
    $region18: #{tpu_custom_call.1} parent=1 // pred_check
      _
    $region19: #{tpu_custom_call.1} parent=1 // pred_check_branch
      %68 = sbr.rel (0) target = $region21
    $region20: #{tpu_custom_call.1} parent=1 // pred_region
      %s70 = ssub.s32 4096, 4096
      %71 = vsyncadd [#allocation9], %s70
      %s72 = sshll.u32 [#allocation10], 4
      %s73 = int_to_ptr.vmem [resolvable:$true] %s72
      %78 = dma.hbm_to_vmem [thread:$0]  %s4, 4096, %s73, [#allocation9], 128, 128, 8
    $region21: #{tpu_custom_call.1} parent=1 // pred_fallthru
      _
    // Predicated region
    $region22: #{tpu_custom_call.1} parent=1 // pred_check
      _
    $region23: #{tpu_custom_call.1} parent=1 // pred_check_branch
      %80 = sbr.rel (0) target = $region25
    $region24: #{tpu_custom_call.1} parent=1 // pred_region
      _
    $region25: #{tpu_custom_call.1} parent=1 // pred_fallthru
      _
    // Predicated region
    $region26: #{tpu_custom_call.1} parent=1 // pred_check
      _
    $region27: #{tpu_custom_call.1} parent=1 // pred_check_branch
      %82 = sbr.rel (0) target = $region29
    $region28: #{tpu_custom_call.1} parent=1 // pred_region
      %s84 = ssub.s32 2048, 2048
      %85 = vsyncadd [#allocation12], %s84
      %s86 = sshll.u32 [#allocation11], 4
      %s87 = int_to_ptr.vmem [resolvable:$true] %s86
      %92 = dma.hbm_to_vmem [thread:$0]  %s6, 2048, %s87, [#allocation12], 128, 128, 8
    $region29: #{tpu_custom_call.1} parent=1 // pred_fallthru
      _
    // Predicated region
    $region30: #{tpu_custom_call.1} parent=1 // pred_check
      _
    $region31: #{tpu_custom_call.1} parent=1 // pred_check_branch
      %94 = sbr.rel (0) target = $region33
    $region32: #{tpu_custom_call.1} parent=1 // pred_region
      _
    $region33: #{tpu_custom_call.1} parent=1 // pred_fallthru
      _
    // Predicated region
    $region34: #{tpu_custom_call.1} parent=1 // pred_check
      _
    $region35: #{tpu_custom_call.1} parent=1 // pred_check_branch
      %96 = sbr.rel (0) target = $region37
    $region36: #{tpu_custom_call.1} parent=1 // pred_region
      %97 = dma.done [#allocation3], 128
    $region37: #{tpu_custom_call.1} parent=1 // pred_fallthru
      _
    // Predicated region
    $region38: #{tpu_custom_call.1} parent=1 // pred_check
      _
    $region39: #{tpu_custom_call.1} parent=1 // pred_check_branch
      %99 = sbr.rel (0) target = $region41
    $region40: #{tpu_custom_call.1} parent=1 // pred_region
      %100 = dma.done [#allocation6], 256
    $region41: #{tpu_custom_call.1} parent=1 // pred_fallthru
      _
    // Predicated region
    $region42: #{tpu_custom_call.1} parent=1 // pred_check
      _
    $region43: #{tpu_custom_call.1} parent=1 // pred_check_branch
      %102 = sbr.rel (0) target = $region45
    $region44: #{tpu_custom_call.1} parent=1 // pred_region
      %103 = dma.done [#allocation6], 2048
    $region45: #{tpu_custom_call.1} parent=1 // pred_fallthru
      _
    // Predicated region
    $region46: #{tpu_custom_call.1} parent=1 // pred_check
      _
    $region47: #{tpu_custom_call.1} parent=1 // pred_check_branch
      %105 = sbr.rel (0) target = $region49
    $region48: #{tpu_custom_call.1} parent=1 // pred_region
      %106 = dma.done [#allocation9], 2048
    $region49: #{tpu_custom_call.1} parent=1 // pred_fallthru
      _
    // Predicated region
    $region50: #{tpu_custom_call.1} parent=1 // pred_check
      _
    $region51: #{tpu_custom_call.1} parent=1 // pred_check_branch
      %108 = sbr.rel (0) target = $region53
    $region52: #{tpu_custom_call.1} parent=1 // pred_region
      %109 = dma.done [#allocation9], 4096
    $region53: #{tpu_custom_call.1} parent=1 // pred_fallthru
      _
    // Predicated region
    $region54: #{tpu_custom_call.1} parent=1 // pred_check
      _
    $region55: #{tpu_custom_call.1} parent=1 // pred_check_branch
      %111 = sbr.rel (0) target = $region57
    $region56: #{tpu_custom_call.1} parent=1 // pred_region
      %112 = dma.done [#allocation12], 2048
    $region57: #{tpu_custom_call.1} parent=1 // pred_fallthru
      _
    %v113 = vld [vmem:[#allocation2] sm:$0xff]
    %v114 = vld [vmem:[#allocation7] sm:$0xff]
    %v115 = vld [vmem:[#allocation7 + $0x8] sm:$0xff]
    %v116 = vld [vmem:[#allocation7 + $0x10] sm:$0xff]
    %v117 = vld [vmem:[#allocation7 + $0x18] sm:$0xff]
    %v118 = vld [vmem:[#allocation7 + $0x20] sm:$0xff]
    %v119 = vld [vmem:[#allocation7 + $0x28] sm:$0xff]
    %v120 = vld [vmem:[#allocation7 + $0x30] sm:$0xff]
    %v121 = vld [vmem:[#allocation7 + $0x38] sm:$0xff]
    %v122 = vld [vmem:[#allocation7 + $0x40] sm:$0xff]
    %v123 = vld [vmem:[#allocation7 + $0x48] sm:$0xff]
    %v124 = vld [vmem:[#allocation7 + $0x50] sm:$0xff]
    %v125 = vld [vmem:[#allocation7 + $0x58] sm:$0xff]
    %v126 = vld [vmem:[#allocation7 + $0x60] sm:$0xff]
    %v127 = vld [vmem:[#allocation7 + $0x68] sm:$0xff]
    %v128 = vld [vmem:[#allocation7 + $0x70] sm:$0xff]
    %v129 = vld [vmem:[#allocation7 + $0x78] sm:$0xff]
    %v130 = vld [vmem:[#allocation5] sm:$0xff]
    %v131 = vld [vmem:[#allocation10] sm:$0xff]
    %v132 = vld [vmem:[#allocation10 + $0x8] sm:$0xff]
    %v133 = vld [vmem:[#allocation10 + $0x10] sm:$0xff]
    %v134 = vld [vmem:[#allocation10 + $0x18] sm:$0xff]
    %v135 = vld [vmem:[#allocation10 + $0x20] sm:$0xff]
    %v136 = vld [vmem:[#allocation10 + $0x28] sm:$0xff]
    %v137 = vld [vmem:[#allocation10 + $0x30] sm:$0xff]
    %v138 = vld [vmem:[#allocation10 + $0x38] sm:$0xff]
    %v139 = vld [vmem:[#allocation10 + $0x40] sm:$0xff]
    %v140 = vld [vmem:[#allocation10 + $0x48] sm:$0xff]
    %v141 = vld [vmem:[#allocation10 + $0x50] sm:$0xff]
    %v142 = vld [vmem:[#allocation10 + $0x58] sm:$0xff]
    %v143 = vld [vmem:[#allocation10 + $0x60] sm:$0xff]
    %v144 = vld [vmem:[#allocation10 + $0x68] sm:$0xff]
    %v145 = vld [vmem:[#allocation10 + $0x70] sm:$0xff]
    %v146 = vld [vmem:[#allocation10 + $0x78] sm:$0xff]
    %147 = vmatprep.subr.mxu0 0.0
    %148 = vmatpush1.msra.mxu0 %v131
    %149 = vmatprep.subr.mxu0 0.0
    %150 = vmatpush1.msra.mxu0 %v132
    %151 = vmatprep.subr.mxu0 0.0
    %152 = vmatpush1.msra.mxu0 %v133
    %153 = vmatprep.subr.mxu0 0.0
    %154 = vmatpush1.msra.mxu0 %v134
    %155 = vmatprep.subr.mxu0 0.0
    %156 = vmatpush1.msra.mxu0 %v135
    %157 = vmatprep.subr.mxu0 0.0
    %158 = vmatpush1.msra.mxu0 %v136
    %159 = vmatprep.subr.mxu0 0.0
    %160 = vmatpush1.msra.mxu0 %v137
    %161 = vmatprep.subr.mxu0 0.0
    %162 = vmatpush1.msra.mxu0 %v138
    %163 = vmatprep.subr.mxu0 0.0
    %164 = vmatpush1.msra.mxu0 %v139
    %165 = vmatprep.subr.mxu0 0.0
    %166 = vmatpush1.msra.mxu0 %v140
    %167 = vmatprep.subr.mxu0 0.0
    %168 = vmatpush1.msra.mxu0 %v141
    %169 = vmatprep.subr.mxu0 0.0
    %170 = vmatpush1.msra.mxu0 %v142
    %171 = vmatprep.subr.mxu0 0.0
    %172 = vmatpush1.msra.mxu0 %v143
    %173 = vmatprep.subr.mxu0 0.0
    %174 = vmatpush1.msra.mxu0 %v144
    %175 = vmatprep.subr.mxu0 0.0
    %176 = vmatpush1.msra.mxu0 %v145
    %177 = vmatprep.subr.mxu0 0.0
    %178 = vmatpush1.msra.mxu0 %v146
    %179 = vmatprep.subr.mxu0 0.0
    %180 = vmatpush1.msra.mxu0 0.0
    %181 = vmatprep.subr.mxu0 0.0
    %182 = vmatpush1.msra.mxu0 0.0
    %183 = vmatprep.subr.mxu0 0.0
    %184 = vmatpush1.msra.mxu0 0.0
    %185 = vmatprep.subr.mxu0 0.0
    %186 = vmatpush1.msra.mxu0 0.0
    %187 = vmatprep.subr.mxu0 0.0
    %188 = vmatpush1.msra.mxu0 0.0
    %189 = vmatprep.subr.mxu0 0.0
    %190 = vmatpush1.msra.mxu0 0.0
    %191 = vmatprep.subr.mxu0 0.0
    %192 = vmatpush1.msra.mxu0 0.0
    %193 = vmatprep.subr.mxu0 0.0
    %194 = vmatpush1.msra.mxu0 0.0
    %195 = vmatprep.subr.mxu0 0.0
    %196 = vmatpush1.msra.mxu0 0.0
    %197 = vmatprep.subr.mxu0 0.0
    %198 = vmatpush1.msra.mxu0 0.0
    %199 = vmatprep.subr.mxu0 0.0
    %200 = vmatpush1.msra.mxu0 0.0
    %201 = vmatprep.subr.mxu0 0.0
    %202 = vmatpush1.msra.mxu0 0.0
    %203 = vmatprep.subr.mxu0 0.0
    %204 = vmatpush1.msra.mxu0 0.0
    %205 = vmatprep.subr.mxu0 0.0
    %206 = vmatpush1.msra.mxu0 0.0
    %207 = vmatprep.subr.mxu0 0.0
    %208 = vmatpush1.msra.mxu0 0.0
    %209 = vmatprep.subr.mxu0 0.0
    %210 = vmatpush1.msra.mxu0 0.0
    %211 = vmatprep.mubr.f32.mxu0 0.0
    %212 = vmatmul.mubr.f32.gmra.mrb[0].mxu0 %v130
    %v213 = vpop.f32.mrb[0].mxu0
    %v214 = vadd.f32 0.0, %v213
    %v215 = vpop.f32.mrb[0].mxu0
    %216 = vdwg.mxu0
    %217 = vmatprep.subr.mxu0 0.0
    %218 = vmatpush1.msra.mxu0 %v114
    %219 = vmatprep.subr.mxu0 0.0
    %220 = vmatpush1.msra.mxu0 %v115
    %221 = vmatprep.subr.mxu0 0.0
    %222 = vmatpush1.msra.mxu0 %v116
    %223 = vmatprep.subr.mxu0 0.0
    %224 = vmatpush1.msra.mxu0 %v117
    %225 = vmatprep.subr.mxu0 0.0
    %226 = vmatpush1.msra.mxu0 %v118
    %227 = vmatprep.subr.mxu0 0.0
    %228 = vmatpush1.msra.mxu0 %v119
    %229 = vmatprep.subr.mxu0 0.0
    %230 = vmatpush1.msra.mxu0 %v120
    %231 = vmatprep.subr.mxu0 0.0
    %232 = vmatpush1.msra.mxu0 %v121
    %233 = vmatprep.subr.mxu0 0.0
    %234 = vmatpush1.msra.mxu0 %v122
    %235 = vmatprep.subr.mxu0 0.0
    %236 = vmatpush1.msra.mxu0 %v123
    %237 = vmatprep.subr.mxu0 0.0
    %238 = vmatpush1.msra.mxu0 %v124
    %239 = vmatprep.subr.mxu0 0.0
    %240 = vmatpush1.msra.mxu0 %v125
    %241 = vmatprep.subr.mxu0 0.0
    %242 = vmatpush1.msra.mxu0 %v126
    %243 = vmatprep.subr.mxu0 0.0
    %244 = vmatpush1.msra.mxu0 %v127
    %245 = vmatprep.subr.mxu0 0.0
    %246 = vmatpush1.msra.mxu0 %v128
    %247 = vmatprep.subr.mxu0 0.0
    %248 = vmatpush1.msra.mxu0 %v129
    %249 = vmatprep.subr.mxu0 0.0
    %250 = vmatpush1.msra.mxu0 0.0
    %251 = vmatprep.subr.mxu0 0.0
    %252 = vmatpush1.msra.mxu0 0.0
    %253 = vmatprep.subr.mxu0 0.0
    %254 = vmatpush1.msra.mxu0 0.0
    %255 = vmatprep.subr.mxu0 0.0
    %256 = vmatpush1.msra.mxu0 0.0
    %257 = vmatprep.subr.mxu0 0.0
    %258 = vmatpush1.msra.mxu0 0.0
    %259 = vmatprep.subr.mxu0 0.0
    %260 = vmatpush1.msra.mxu0 0.0
    %261 = vmatprep.subr.mxu0 0.0
    %262 = vmatpush1.msra.mxu0 0.0
    %263 = vmatprep.subr.mxu0 0.0
    %264 = vmatpush1.msra.mxu0 0.0
    %265 = vmatprep.subr.mxu0 0.0
    %266 = vmatpush1.msra.mxu0 0.0
    %267 = vmatprep.subr.mxu0 0.0
    %268 = vmatpush1.msra.mxu0 0.0
    %269 = vmatprep.subr.mxu0 0.0
    %270 = vmatpush1.msra.mxu0 0.0
    %271 = vmatprep.subr.mxu0 0.0
    %272 = vmatpush1.msra.mxu0 0.0
    %273 = vmatprep.subr.mxu0 0.0
    %274 = vmatpush1.msra.mxu0 0.0
    %275 = vmatprep.subr.mxu0 0.0
    %276 = vmatpush1.msra.mxu0 0.0
    %277 = vmatprep.subr.mxu0 0.0
    %278 = vmatpush1.msra.mxu0 0.0
    %279 = vmatprep.subr.mxu0 0.0
    %280 = vmatpush1.msra.mxu0 0.0
    %281 = vmatprep.mubr.f32.mxu0 0.0
    %282 = vmatmul.mubr.f32.gmra.mrb[0].mxu0 %v113
    %v283 = vpop.f32.mrb[0].mxu0
    %v284 = vadd.f32 %v214, %v283
    %v285 = vpop.f32.mrb[0].mxu0
    %286 = vdwg.mxu0
    %v287 = vld [vmem:[%s5] sm:$0x1]
    %v289 = vlaneseq
    %v290 = vshrl.u32 %v289, 7
    %v291 = vsub.s32 0, %v290
    %v292 = vrot.slane %v287, %v291
    %v294 = vadd.f32 %v284, %v292
    %v295 = vmax.f32 %v294, 0.0
    %296 = vst [vmem:[#allocation14] sm:$0xff] %v295
    %v297 = vld [vmem:[#allocation8] sm:$0xff]
    %v298 = vld [vmem:[#allocation8 + $0x8] sm:$0xff]
    %v299 = vld [vmem:[#allocation8 + $0x10] sm:$0xff]
    %v300 = vld [vmem:[#allocation8 + $0x18] sm:$0xff]
    %v301 = vld [vmem:[#allocation8 + $0x20] sm:$0xff]
    %v302 = vld [vmem:[#allocation8 + $0x28] sm:$0xff]
    %v303 = vld [vmem:[#allocation8 + $0x30] sm:$0xff]
    %v304 = vld [vmem:[#allocation8 + $0x38] sm:$0xff]
    %v305 = vld [vmem:[#allocation8 + $0x40] sm:$0xff]
    %v306 = vld [vmem:[#allocation8 + $0x48] sm:$0xff]
    %v307 = vld [vmem:[#allocation8 + $0x50] sm:$0xff]
    %v308 = vld [vmem:[#allocation8 + $0x58] sm:$0xff]
    %v309 = vld [vmem:[#allocation8 + $0x60] sm:$0xff]
    %v310 = vld [vmem:[#allocation8 + $0x68] sm:$0xff]
    %v311 = vld [vmem:[#allocation8 + $0x70] sm:$0xff]
    %v312 = vld [vmem:[#allocation8 + $0x78] sm:$0xff]
    %s313 = scalar_lea.vmem [#allocation5], 8
    %v314 = vld [vmem:[%s313] sm:$0xff]
    %s315 = scalar_lea.vmem [#allocation10], 128
    %v316 = vld [vmem:[%s315] sm:$0xff]
    %v317 = vld [vmem:[%s315 + $0x8] sm:$0xff]
    %v318 = vld [vmem:[%s315 + $0x10] sm:$0xff]
    %v319 = vld [vmem:[%s315 + $0x18] sm:$0xff]
    %v320 = vld [vmem:[%s315 + $0x20] sm:$0xff]
    %v321 = vld [vmem:[%s315 + $0x28] sm:$0xff]
    %v322 = vld [vmem:[%s315 + $0x30] sm:$0xff]
    %v323 = vld [vmem:[%s315 + $0x38] sm:$0xff]
    %v324 = vld [vmem:[%s315 + $0x40] sm:$0xff]
    %v325 = vld [vmem:[%s315 + $0x48] sm:$0xff]
    %v326 = vld [vmem:[%s315 + $0x50] sm:$0xff]
    %v327 = vld [vmem:[%s315 + $0x58] sm:$0xff]
    %v328 = vld [vmem:[%s315 + $0x60] sm:$0xff]
    %v329 = vld [vmem:[%s315 + $0x68] sm:$0xff]
    %v330 = vld [vmem:[%s315 + $0x70] sm:$0xff]
    %v331 = vld [vmem:[%s315 + $0x78] sm:$0xff]
    %332 = vmatprep.subr.mxu0 0.0
    %333 = vmatpush1.msra.mxu0 %v316
    %334 = vmatprep.subr.mxu0 0.0
    %335 = vmatpush1.msra.mxu0 %v317
    %336 = vmatprep.subr.mxu0 0.0
    %337 = vmatpush1.msra.mxu0 %v318
    %338 = vmatprep.subr.mxu0 0.0
    %339 = vmatpush1.msra.mxu0 %v319
    %340 = vmatprep.subr.mxu0 0.0
    %341 = vmatpush1.msra.mxu0 %v320
    %342 = vmatprep.subr.mxu0 0.0
    %343 = vmatpush1.msra.mxu0 %v321
    %344 = vmatprep.subr.mxu0 0.0
    %345 = vmatpush1.msra.mxu0 %v322
    %346 = vmatprep.subr.mxu0 0.0
    %347 = vmatpush1.msra.mxu0 %v323
    %348 = vmatprep.subr.mxu0 0.0
    %349 = vmatpush1.msra.mxu0 %v324
    %350 = vmatprep.subr.mxu0 0.0
    %351 = vmatpush1.msra.mxu0 %v325
    %352 = vmatprep.subr.mxu0 0.0
    %353 = vmatpush1.msra.mxu0 %v326
    %354 = vmatprep.subr.mxu0 0.0
    %355 = vmatpush1.msra.mxu0 %v327
    %356 = vmatprep.subr.mxu0 0.0
    %357 = vmatpush1.msra.mxu0 %v328
    %358 = vmatprep.subr.mxu0 0.0
    %359 = vmatpush1.msra.mxu0 %v329
    %360 = vmatprep.subr.mxu0 0.0
    %361 = vmatpush1.msra.mxu0 %v330
    %362 = vmatprep.subr.mxu0 0.0
    %363 = vmatpush1.msra.mxu0 %v331
    %364 = vmatprep.subr.mxu0 0.0
    %365 = vmatpush1.msra.mxu0 0.0
    %366 = vmatprep.subr.mxu0 0.0
    %367 = vmatpush1.msra.mxu0 0.0
    %368 = vmatprep.subr.mxu0 0.0
    %369 = vmatpush1.msra.mxu0 0.0
    %370 = vmatprep.subr.mxu0 0.0
    %371 = vmatpush1.msra.mxu0 0.0
    %372 = vmatprep.subr.mxu0 0.0
    %373 = vmatpush1.msra.mxu0 0.0
    %374 = vmatprep.subr.mxu0 0.0
    %375 = vmatpush1.msra.mxu0 0.0
    %376 = vmatprep.subr.mxu0 0.0
    %377 = vmatpush1.msra.mxu0 0.0
    %378 = vmatprep.subr.mxu0 0.0
    %379 = vmatpush1.msra.mxu0 0.0
    %380 = vmatprep.subr.mxu0 0.0
    %381 = vmatpush1.msra.mxu0 0.0
    %382 = vmatprep.subr.mxu0 0.0
    %383 = vmatpush1.msra.mxu0 0.0
    %384 = vmatprep.subr.mxu0 0.0
    %385 = vmatpush1.msra.mxu0 0.0
    %386 = vmatprep.subr.mxu0 0.0
    %387 = vmatpush1.msra.mxu0 0.0
    %388 = vmatprep.subr.mxu0 0.0
    %389 = vmatpush1.msra.mxu0 0.0
    %390 = vmatprep.subr.mxu0 0.0
    %391 = vmatpush1.msra.mxu0 0.0
    %392 = vmatprep.subr.mxu0 0.0
    %393 = vmatpush1.msra.mxu0 0.0
    %394 = vmatprep.subr.mxu0 0.0
    %395 = vmatpush1.msra.mxu0 0.0
    %396 = vmatprep.mubr.f32.mxu0 0.0
    %397 = vmatmul.mubr.f32.gmra.mrb[0].mxu0 %v314
    %v398 = vpop.f32.mrb[0].mxu0
    %v399 = vadd.f32 0.0, %v398
    %v400 = vpop.f32.mrb[0].mxu0
    %401 = vdwg.mxu0
    %402 = vmatprep.subr.mxu0 0.0
    %403 = vmatpush1.msra.mxu0 %v297
    %404 = vmatprep.subr.mxu0 0.0
    %405 = vmatpush1.msra.mxu0 %v298
    %406 = vmatprep.subr.mxu0 0.0
    %407 = vmatpush1.msra.mxu0 %v299
    %408 = vmatprep.subr.mxu0 0.0
    %409 = vmatpush1.msra.mxu0 %v300
    %410 = vmatprep.subr.mxu0 0.0
    %411 = vmatpush1.msra.mxu0 %v301
    %412 = vmatprep.subr.mxu0 0.0
    %413 = vmatpush1.msra.mxu0 %v302
    %414 = vmatprep.subr.mxu0 0.0
    %415 = vmatpush1.msra.mxu0 %v303
    %416 = vmatprep.subr.mxu0 0.0
    %417 = vmatpush1.msra.mxu0 %v304
    %418 = vmatprep.subr.mxu0 0.0
    %419 = vmatpush1.msra.mxu0 %v305
    %420 = vmatprep.subr.mxu0 0.0
    %421 = vmatpush1.msra.mxu0 %v306
    %422 = vmatprep.subr.mxu0 0.0
    %423 = vmatpush1.msra.mxu0 %v307
    %424 = vmatprep.subr.mxu0 0.0
    %425 = vmatpush1.msra.mxu0 %v308
    %426 = vmatprep.subr.mxu0 0.0
    %427 = vmatpush1.msra.mxu0 %v309
    %428 = vmatprep.subr.mxu0 0.0
    %429 = vmatpush1.msra.mxu0 %v310
    %430 = vmatprep.subr.mxu0 0.0
    %431 = vmatpush1.msra.mxu0 %v311
    %432 = vmatprep.subr.mxu0 0.0
    %433 = vmatpush1.msra.mxu0 %v312
    %434 = vmatprep.subr.mxu0 0.0
    %435 = vmatpush1.msra.mxu0 0.0
    %436 = vmatprep.subr.mxu0 0.0
    %437 = vmatpush1.msra.mxu0 0.0
    %438 = vmatprep.subr.mxu0 0.0
    %439 = vmatpush1.msra.mxu0 0.0
    %440 = vmatprep.subr.mxu0 0.0
    %441 = vmatpush1.msra.mxu0 0.0
    %442 = vmatprep.subr.mxu0 0.0
    %443 = vmatpush1.msra.mxu0 0.0
    %444 = vmatprep.subr.mxu0 0.0
    %445 = vmatpush1.msra.mxu0 0.0
    %446 = vmatprep.subr.mxu0 0.0
    %447 = vmatpush1.msra.mxu0 0.0
    %448 = vmatprep.subr.mxu0 0.0
    %449 = vmatpush1.msra.mxu0 0.0
    %450 = vmatprep.subr.mxu0 0.0
    %451 = vmatpush1.msra.mxu0 0.0
    %452 = vmatprep.subr.mxu0 0.0
    %453 = vmatpush1.msra.mxu0 0.0
    %454 = vmatprep.subr.mxu0 0.0
    %455 = vmatpush1.msra.mxu0 0.0
    %456 = vmatprep.subr.mxu0 0.0
    %457 = vmatpush1.msra.mxu0 0.0
    %458 = vmatprep.subr.mxu0 0.0
    %459 = vmatpush1.msra.mxu0 0.0
    %460 = vmatprep.subr.mxu0 0.0
    %461 = vmatpush1.msra.mxu0 0.0
    %462 = vmatprep.subr.mxu0 0.0
    %463 = vmatpush1.msra.mxu0 0.0
    %464 = vmatprep.subr.mxu0 0.0
    %465 = vmatpush1.msra.mxu0 0.0
    %466 = vmatprep.mubr.f32.mxu0 0.0
    %467 = vmatmul.mubr.f32.gmra.mrb[0].mxu0 %v295
    %v468 = vpop.f32.mrb[0].mxu0
    %v469 = vadd.f32 %v399, %v468
    %v470 = vpop.f32.mrb[0].mxu0
    %471 = vdwg.mxu0
    %s472 = scalar_lea.vmem %s5, 1
    %v473 = vld [vmem:[%s472] sm:$0x1]
    %v475 = vlaneseq
    %v476 = vshrl.u32 %v475, 7
    %v477 = vsub.s32 0, %v476
    %v478 = vrot.slane %v473, %v477
    %v480 = vadd.f32 %v469, %v478
    %v481 = vmax.f32 %v480, 0.0
    %s482 = scalar_lea.vmem [#allocation14], 8
    %483 = vst [vmem:[%s482] sm:$0xff] %v481
    %v484 = vld [vmem:[#allocation11] sm:$0xff]
    %v485 = vld [vmem:[#allocation11 + $0x8] sm:$0xff]
    %v486 = vld [vmem:[#allocation11 + $0x10] sm:$0xff]
    %v487 = vld [vmem:[#allocation11 + $0x18] sm:$0xff]
    %v488 = vld [vmem:[#allocation11 + $0x20] sm:$0xff]
    %v489 = vld [vmem:[#allocation11 + $0x28] sm:$0xff]
    %v490 = vld [vmem:[#allocation11 + $0x30] sm:$0xff]
    %v491 = vld [vmem:[#allocation11 + $0x38] sm:$0xff]
    %v492 = vld [vmem:[#allocation11 + $0x40] sm:$0xff]
    %v493 = vld [vmem:[#allocation11 + $0x48] sm:$0xff]
    %v494 = vld [vmem:[#allocation11 + $0x50] sm:$0xff]
    %v495 = vld [vmem:[#allocation11 + $0x58] sm:$0xff]
    %v496 = vld [vmem:[#allocation11 + $0x60] sm:$0xff]
    %v497 = vld [vmem:[#allocation11 + $0x68] sm:$0xff]
    %v498 = vld [vmem:[#allocation11 + $0x70] sm:$0xff]
    %v499 = vld [vmem:[#allocation11 + $0x78] sm:$0xff]
    %v500 = vld [vmem:[%s7] sm:$0x1]
    %v502 = vlaneseq
    %v503 = vshrl.u32 %v502, 7
    %v504 = vsub.s32 0, %v503
    %v505 = vrot.slane %v500, %v504
    %507 = vmatprep.subr.mxu0 0.0
    %508 = vmatpush1.msra.mxu0 %v484
    %509 = vmatprep.subr.mxu0 0.0
    %510 = vmatpush1.msra.mxu0 %v485
    %511 = vmatprep.subr.mxu0 0.0
    %512 = vmatpush1.msra.mxu0 %v486
    %513 = vmatprep.subr.mxu0 0.0
    %514 = vmatpush1.msra.mxu0 %v487
    %515 = vmatprep.subr.mxu0 0.0
    %516 = vmatpush1.msra.mxu0 %v488
    %517 = vmatprep.subr.mxu0 0.0
    %518 = vmatpush1.msra.mxu0 %v489
    %519 = vmatprep.subr.mxu0 0.0
    %520 = vmatpush1.msra.mxu0 %v490
    %521 = vmatprep.subr.mxu0 0.0
    %522 = vmatpush1.msra.mxu0 %v491
    %523 = vmatprep.subr.mxu0 0.0
    %524 = vmatpush1.msra.mxu0 %v492
    %525 = vmatprep.subr.mxu0 0.0
    %526 = vmatpush1.msra.mxu0 %v493
    %527 = vmatprep.subr.mxu0 0.0
    %528 = vmatpush1.msra.mxu0 %v494
    %529 = vmatprep.subr.mxu0 0.0
    %530 = vmatpush1.msra.mxu0 %v495
    %531 = vmatprep.subr.mxu0 0.0
    %532 = vmatpush1.msra.mxu0 %v496
    %533 = vmatprep.subr.mxu0 0.0
    %534 = vmatpush1.msra.mxu0 %v497
    %535 = vmatprep.subr.mxu0 0.0
    %536 = vmatpush1.msra.mxu0 %v498
    %537 = vmatprep.subr.mxu0 0.0
    %538 = vmatpush1.msra.mxu0 %v499
    %539 = vmatprep.subr.mxu0 0.0
    %540 = vmatpush1.msra.mxu0 0.0
    %541 = vmatprep.subr.mxu0 0.0
    %542 = vmatpush1.msra.mxu0 0.0
    %543 = vmatprep.subr.mxu0 0.0
    %544 = vmatpush1.msra.mxu0 0.0
    %545 = vmatprep.subr.mxu0 0.0
    %546 = vmatpush1.msra.mxu0 0.0
    %547 = vmatprep.subr.mxu0 0.0
    %548 = vmatpush1.msra.mxu0 0.0
    %549 = vmatprep.subr.mxu0 0.0
    %550 = vmatpush1.msra.mxu0 0.0
    %551 = vmatprep.subr.mxu0 0.0
    %552 = vmatpush1.msra.mxu0 0.0
    %553 = vmatprep.subr.mxu0 0.0
    %554 = vmatpush1.msra.mxu0 0.0
    %555 = vmatprep.subr.mxu0 0.0
    %556 = vmatpush1.msra.mxu0 0.0
    %557 = vmatprep.subr.mxu0 0.0
    %558 = vmatpush1.msra.mxu0 0.0
    %559 = vmatprep.subr.mxu0 0.0
    %560 = vmatpush1.msra.mxu0 0.0
    %561 = vmatprep.subr.mxu0 0.0
    %562 = vmatpush1.msra.mxu0 0.0
    %563 = vmatprep.subr.mxu0 0.0
    %564 = vmatpush1.msra.mxu0 0.0
    %565 = vmatprep.subr.mxu0 0.0
    %566 = vmatpush1.msra.mxu0 0.0
    %567 = vmatprep.subr.mxu0 0.0
    %568 = vmatpush1.msra.mxu0 0.0
    %569 = vmatprep.subr.mxu0 0.0
    %570 = vmatpush1.msra.mxu0 0.0
    %571 = vmatprep.mubr.f32.mxu0 0.0
    %572 = vmatmul.mubr.f32.gmra.mrb[0].mxu0 %v481
    %v573 = vpop.f32.mrb[0].mxu0
    %v574 = vadd.f32 %v505, %v573
    %v575 = vpop.f32.mrb[0].mxu0
    %576 = vdwg.mxu0
    %577 = vst [vmem:[#allocation13] sm:$0xff] %v574
    // Predicated region
    $region58: #{tpu_custom_call.1} parent=1 // pred_check
      _
    $region59: #{tpu_custom_call.1} parent=1 // pred_check_branch
      %579 = sbr.rel (0) target = $region61
    $region60: #{tpu_custom_call.1} parent=1 // pred_region
      %s581 = ssub.s32 128, 128
      %582 = vsyncadd [#allocation4], %s581
      %s584 = sshll.u32 [#allocation13], 4
      %s585 = int_to_ptr.vmem [resolvable:$true] %s584
      %587 = dma.vmem_to_hbm [thread:$0]  %s585, 128, %s8, [#allocation4]
    $region61: #{tpu_custom_call.1} parent=1 // pred_fallthru
      _
    // Predicated region
    $region62: #{tpu_custom_call.1} parent=1 // pred_check
      _
    $region63: #{tpu_custom_call.1} parent=1 // pred_check_branch
      %589 = sbr.rel (0) target = $region65
    $region64: #{tpu_custom_call.1} parent=1 // pred_region
      %s591 = ssub.s32 256, 256
      %592 = vsyncadd [#allocation15], %s591
      %s593 = sshll.u32 [#allocation14], 4
      %s594 = int_to_ptr.vmem [resolvable:$true] %s593
      %599 = dma.vmem_to_hbm [thread:$0]  %s594, 256, %s9, [#allocation15], 128, 128, 8
    $region65: #{tpu_custom_call.1} parent=1 // pred_fallthru
      _
    // Predicated region
    $region66: #{tpu_custom_call.1} parent=1 // pred_check
      _
    $region67: #{tpu_custom_call.1} parent=1 // pred_check_branch
      %601 = sbr.rel (0) target = $region69
    $region68: #{tpu_custom_call.1} parent=1 // pred_region
      %602 = dma.done [#allocation4], 128
    $region69: #{tpu_custom_call.1} parent=1 // pred_fallthru
      _
    // Predicated region
    $region70: #{tpu_custom_call.1} parent=1 // pred_check
      _
    $region71: #{tpu_custom_call.1} parent=1 // pred_check_branch
      %604 = sbr.rel (0) target = $region73
    $region72: #{tpu_custom_call.1} parent=1 // pred_region
      %605 = dma.done [#allocation15], 256
    $region73: #{tpu_custom_call.1} parent=1 // pred_fallthru
      _
    %606 = vsyncpa [#allocation3], 1
    %607 = vsyncpa [#allocation6], 1
    %608 = vsyncpa [#allocation9], 1
    %609 = vsyncpa [#allocation12], 1
    %610 = vsyncpa [#allocation4], 1
    %611 = vsyncpa [#allocation15], 1

</llo_original>
